<compile_context>
chip_gen: v5e
topology: v5e:2x2
jax: 0.10.0
libtpu: 0.0.40
codegen_flags: <defaults>
</compile_context>

<pallas_src>
import functools

import jax
import jax.numpy as jnp
from jax.experimental import pallas as pl
from jax.experimental.pallas import tpu as pltpu


def _cdiv(a, b):
    return -(-a // b)


def _round_up(a, b):
    return _cdiv(a, b) * b


def _phase_matmul_kernel(xw_ref, g_ref, b_ref, out_ref, *, Th, Tw, Ws):
    """One (batch, row-tile) grid step.

    xw_ref : (Cin_pad, Lw_pad)   flattened (row-major, stride Ws) padded input window
    g_ref  : (Th*Tw, M, Cin_pad) folded polyphase weights, one (M, Cin_pad) slab / tap
    b_ref  : (M, 1)              f32 bias, phase-major
    out_ref: (M, NC_pad)         phase-major output tile, flattened spatial on lanes
    """
    L = xw_ref.shape[1]           # Lw_pad (multiple of 128)
    NC = out_ref.shape[1]         # NC_pad (multiple of 128)

    x = xw_ref[...]               # load the window once; taps are lane shifts of it
    acc = None
    for uh in range(Th):
        for uw in range(Tw):
            s = uh * Ws + uw      # constant lane shift for this tap
            if s == 0:
                cols = x[:, :NC]
            else:
                # XLU lane rotation instead of an unaligned slice / relayout.
                cols = pltpu.roll(x, shift=L - s, axis=1)[:, :NC]
            d = jnp.dot(g_ref[uh * Tw + uw], cols,
                        preferred_element_type=jnp.float32)
            acc = d if acc is None else acc + d
    out_ref[...] = (acc + b_ref[...]).astype(out_ref.dtype)


def upsample_conv_transpose2d(x_nchw, weight, bias, stride, *, rows_per_tile=None):
    """nn.ConvTranspose2d(input_dim, output_dim, kernel, stride) forward.

    x_nchw : (N, Cin, H, W)        PyTorch NCHW input
    weight : (Cin, Cout, kH, kW)   PyTorch ConvTranspose2d weight layout
    bias   : (Cout,)
    """
    N, Cin, H, W = x_nchw.shape
    wCin, Cout, kH, kW = weight.shape
    assert wCin == Cin
    S = int(stride)
    H_out = (H - 1) * S + kH
    W_out = (W - 1) * S + kW

    Th = _cdiv(kH, S)                  # taps per phase along H
    Tw = _cdiv(kW, S)                  # taps per phase along W
    Hp = H + Th - 1                    # per-phase output rows
    Wp = W + Tw - 1                    # per-phase output cols (valid part of a row)
    Ws = W + 2 * (Tw - 1)              # flattened row stride == padded input width
    Cin_pad = _round_up(Cin, 8)        # sublane-aligned contraction slabs
    M = S * S * Cout                   # phase-major output channels
    dtype = x_nchw.dtype
    ib = jnp.dtype(dtype).itemsize

    # ---- row-tile selection: budget TOTAL per-step VMEM, keep MXU result in vregs ----
    def _bufs(r):
        nc = _round_up(r * Ws, 128)
        lw = _round_up((r + Th - 1) * Ws, 128)
        total = (2 * Cin_pad * lw * ib            # input window double buffer
                 + 2 * M * nc * ib                # output tile double buffer
                 + Th * Tw * M * Cin_pad * ib     # weights (resident)
                 + 4 * M)                         # bias
        acc = 4 * M * nc                          # f32 accumulator (held in vregs)
        return nc, lw, total, acc

    if rows_per_tile is None:
        R = 1
        for r in range(1, Hp + 1):
            _, _, tot, acc = _bufs(r)
            if tot > 24 * 2**20 or acc > 128 * 2**10:
                break
            R = r
        if N == 1:                                # v7x: 2 TCs — keep both busy
            R = min(R, max(1, _cdiv(Hp, 2)))
    else:
        R = max(1, min(int(rows_per_tile), Hp))
    n_tiles = _cdiv(Hp, R)
    Rw = R + Th - 1                               # window rows incl. halo
    NC_pad, Lw_pad, vmem_need, _ = _bufs(R)

    # ---- compact zero-padded input, flattened row-major (no dilated tensor ever built) ----
    x_pad = jnp.pad(x_nchw, ((0, 0), (0, Cin_pad - Cin),
                             (Th - 1, n_tiles * R - H), (Tw - 1, Tw - 1)))
    # overlapping row windows (halo = Th-1 rows) -> (N, n_tiles, Cin_pad, Lw_pad)
    xw = jnp.stack([x_pad[:, :, t * R:t * R + Rw, :] for t in range(n_tiles)], axis=1)
    xw = xw.reshape(N, n_tiles, Cin_pad, Rw * Ws)
    xw = jnp.pad(xw, ((0, 0), (0, 0), (0, 0), (0, Lw_pad - Rw * Ws)))

    # ---- folded polyphase weights, tap-major: (Th*Tw, M, Cin_pad) --------------------------
    # G[uh*Tw+uw, (dh*S+dw)*Cout+co, ci] = weight[ci, co, dh+S*(Th-1-uh), dw+S*(Tw-1-uw)]
    G = jnp.zeros((Th, Tw, S, S, Cout, Cin_pad), dtype)
    for dh in range(S):
        for uh in range(Th):
            kh = dh + S * (Th - 1 - uh)
            if kh >= kH:
                continue
            for dw in range(S):
                for uw in range(Tw):
                    kw_ = dw + S * (Tw - 1 - uw)
                    if kw_ >= kW:
                        continue
                    G = G.at[uh, uw, dh, dw, :, :Cin].set(
                        weight[:, :, kh, kw_].astype(dtype).T)
    G = G.reshape(Th * Tw, M, Cin_pad)
    b_col = jnp.tile(bias.astype(jnp.float32), S * S).reshape(M, 1)

    kernel = functools.partial(_phase_matmul_kernel, Th=Th, Tw=Tw, Ws=Ws)

    yp = pl.pallas_call(
        kernel,
        out_shape=jax.ShapeDtypeStruct((N, n_tiles, M, NC_pad), dtype),
        grid_spec=pltpu.PrefetchScalarGridSpec(
            num_scalar_prefetch=0,
            grid=(N, n_tiles),
            in_specs=[
                pl.BlockSpec((None, None, Cin_pad, Lw_pad), lambda n, t: (n, t, 0, 0)),
                pl.BlockSpec((Th * Tw, M, Cin_pad), lambda n, t: (0, 0, 0)),
                pl.BlockSpec((M, 1), lambda n, t: (0, 0)),
            ],
            out_specs=pl.BlockSpec((None, None, M, NC_pad), lambda n, t: (n, t, 0, 0)),
        ),
        compiler_params=pltpu.CompilerParams(
            dimension_semantics=("parallel", "parallel"),
            vmem_limit_bytes=int(max(32 * 2**20, min(48 * 2**20, 2 * vmem_need))),
        ),
    )(xw, G, b_col)

    # ---- single transpose/reshape de-interleave (no strided scatters, no zero-fill) -------
    # yp[n, t, (dh*S+dw)*Cout+co, r*Ws+w] -> out[n, co, (t*R+r)*S+dh, w*S+dw]
    y = yp[:, :, :, :R * Ws].reshape(N, n_tiles, S, S, Cout, R, Ws)
    y = jnp.transpose(y, (0, 4, 1, 5, 2, 6, 3))        # (N, Cout, tiles, R, dh, Ws, dw)
    out = y.reshape(N, Cout, n_tiles * R * S, Ws * S)[:, :, :H_out, :W_out]
    return out


def _reference_conv_transpose2d(x, w, b, S):
    """Definition-level reference in plain JAX, independent of the kernel path."""
    N, Cin, H, W = x.shape
    _, Cout, kH, kW = w.shape
    H_out = (H - 1) * S + kH
    W_out = (W - 1) * S + kW
    y = jnp.zeros((N, Cout, H_out, W_out), jnp.float32)
    for kh in range(kH):
        for kw in range(kW):
            contrib = jnp.einsum('nchw,cd->ndhw', x, w[:, :, kh, kw])
            y = y.at[:, :, kh:kh + (H - 1) * S + 1:S,
                           kw:kw + (W - 1) * S + 1:S].add(contrib)
    return y + b[None, :, None, None]


if __name__ == "__main__":
    key = jax.random.PRNGKey(0)
    k_x, k_w, k_b = jax.random.split(key, 3)

    # Upsample(input_dim=4, output_dim=8, kernel=3, stride=2)
    input_dim, output_dim, kernel, stride = 4, 8, 3, 2
    N, H, W = 2, 16, 16

    x = jax.random.normal(k_x, (N, input_dim, H, W), jnp.float32)
    weight = jax.random.normal(k_w, (input_dim, output_dim, kernel, kernel),
                               jnp.float32) * 0.1
    bias = jax.random.normal(k_b, (output_dim,), jnp.float32) * 0.1

    ref = _reference_conv_transpose2d(x, weight, bias, stride)

    # rows_per_tile=6 forces 3 row-tiles so the halo windows + stitching are exercised.
    fwd = jax.jit(functools.partial(upsample_conv_transpose2d,
                                    stride=stride, rows_per_tile=6))
    out = jax.block_until_ready(fwd(x, weight, bias))
    assert out.shape == ref.shape, (out.shape, ref.shape)
    err = float(jnp.max(jnp.abs(out - ref)))
    assert err < 1e-4, f"max abs err {err}"

    # auto-tiling path (single row tile at this size)
    out2 = jax.block_until_ready(
        jax.jit(functools.partial(upsample_conv_transpose2d, stride=stride))(x, weight, bias))
    err2 = float(jnp.max(jnp.abs(out2 - ref)))
    assert err2 < 1e-4, f"max abs err {err2}"

    print("KERNEL_OK")
</pallas_src>

<mosaic_0001>
module attributes {stable_mosaic.version = 11 : i64} {
  func.func @_phase_matmul_kernel(%arg0: i32, %arg1: i32, %arg2: memref<1x1x8x128xf32, #tpu.memory_space<vmem>>, %arg3: memref<4x32x8xf32, #tpu.memory_space<vmem>>, %arg4: memref<32x1xf32, #tpu.memory_space<vmem>>, %arg5: memref<1x1x32x128xf32, #tpu.memory_space<vmem>>) attributes {dimension_semantics = [#tpu.dimension_semantics<parallel>, #tpu.dimension_semantics<parallel>], iteration_bounds = array<i64: 2, 3>, scalar_prefetch = 0 : i64, scratch_operands = 0 : i64, tpu.core_type = #tpu.core_type<tc>, window_params = [{transform_indices = @transform_0, window_bounds = array<i64: 1, 1, 8, 128>}, {pipeline_mode = #tpu.pipeline_mode<synchronous>, transform_indices = @transform_1, window_bounds = array<i64: 4, 32, 8>}, {pipeline_mode = #tpu.pipeline_mode<synchronous>, transform_indices = @transform_2, window_bounds = array<i64: 32, 1>}, {transform_indices = @transform_3, window_bounds = array<i64: 1, 1, 32, 128>}]} {
    %c0 = arith.constant 0 : index
    %c0_0 = arith.constant 0 : index
    %c0_1 = arith.constant 0 : index
    %c0_2 = arith.constant 0 : index
    %0 = vector.load %arg2[%c0, %c0_0, %c0_1, %c0_2] : memref<1x1x8x128xf32, #tpu.memory_space<vmem>>, vector<1x1x8x128xf32>
    %1 = vector.shape_cast %0 : vector<1x1x8x128xf32> to vector<8x128xf32>
    %c0_3 = arith.constant 0 : index
    %c0_4 = arith.constant 0 : index
    %c0_5 = arith.constant 0 : index
    %2 = vector.load %arg3[%c0_3, %c0_4, %c0_5] : memref<4x32x8xf32, #tpu.memory_space<vmem>>, vector<1x32x8xf32>
    %3 = vector.shape_cast %2 : vector<1x32x8xf32> to vector<32x8xf32>
    %cst = arith.constant dense<0.000000e+00> : vector<32x128xf32>
    %4 = tpu.matmul %3, %1, %cst {dimension_numbers = #tpu.dot_dimension_numbers<[1], [0], [0], [1], [0, 0, 1, 1], [], []>} : vector<32x8xf32>, vector<8x128xf32>, vector<32x128xf32> -> vector<32x128xf32>
    %c127_i32 = arith.constant 127 : i32
    %5 = tpu.dynamic_rotate %1 by %c127_i32 dim 1 : vector<8x128xf32>, i32 -> vector<8x128xf32>
    %c1 = arith.constant 1 : index
    %c0_6 = arith.constant 0 : index
    %c0_7 = arith.constant 0 : index
    %6 = vector.load %arg3[%c1, %c0_6, %c0_7] : memref<4x32x8xf32, #tpu.memory_space<vmem>>, vector<1x32x8xf32>
    %7 = vector.shape_cast %6 : vector<1x32x8xf32> to vector<32x8xf32>
    %cst_8 = arith.constant dense<0.000000e+00> : vector<32x128xf32>
    %8 = tpu.matmul %7, %5, %cst_8 {dimension_numbers = #tpu.dot_dimension_numbers<[1], [0], [0], [1], [0, 0, 1, 1], [], []>} : vector<32x8xf32>, vector<8x128xf32>, vector<32x128xf32> -> vector<32x128xf32>
    %9 = arith.addf %4, %8 : vector<32x128xf32>
    %c110_i32 = arith.constant 110 : i32
    %10 = tpu.dynamic_rotate %1 by %c110_i32 dim 1 : vector<8x128xf32>, i32 -> vector<8x128xf32>
    %c2 = arith.constant 2 : index
    %c0_9 = arith.constant 0 : index
    %c0_10 = arith.constant 0 : index
    %11 = vector.load %arg3[%c2, %c0_9, %c0_10] : memref<4x32x8xf32, #tpu.memory_space<vmem>>, vector<1x32x8xf32>
    %12 = vector.shape_cast %11 : vector<1x32x8xf32> to vector<32x8xf32>
    %cst_11 = arith.constant dense<0.000000e+00> : vector<32x128xf32>
    %13 = tpu.matmul %12, %10, %cst_11 {dimension_numbers = #tpu.dot_dimension_numbers<[1], [0], [0], [1], [0, 0, 1, 1], [], []>} : vector<32x8xf32>, vector<8x128xf32>, vector<32x128xf32> -> vector<32x128xf32>
    %14 = arith.addf %9, %13 : vector<32x128xf32>
    %c109_i32 = arith.constant 109 : i32
    %15 = tpu.dynamic_rotate %1 by %c109_i32 dim 1 : vector<8x128xf32>, i32 -> vector<8x128xf32>
    %c3 = arith.constant 3 : index
    %c0_12 = arith.constant 0 : index
    %c0_13 = arith.constant 0 : index
    %16 = vector.load %arg3[%c3, %c0_12, %c0_13] : memref<4x32x8xf32, #tpu.memory_space<vmem>>, vector<1x32x8xf32>
    %17 = vector.shape_cast %16 : vector<1x32x8xf32> to vector<32x8xf32>
    %cst_14 = arith.constant dense<0.000000e+00> : vector<32x128xf32>
    %18 = tpu.matmul %17, %15, %cst_14 {dimension_numbers = #tpu.dot_dimension_numbers<[1], [0], [0], [1], [0, 0, 1, 1], [], []>} : vector<32x8xf32>, vector<8x128xf32>, vector<32x128xf32> -> vector<32x128xf32>
    %19 = arith.addf %14, %18 : vector<32x128xf32>
    %c0_15 = arith.constant 0 : index
    %c0_16 = arith.constant 0 : index
    %20 = vector.load %arg4[%c0_15, %c0_16] : memref<32x1xf32, #tpu.memory_space<vmem>>, vector<32x1xf32>
    %21 = vector.broadcast %20 : vector<32x1xf32> to vector<32x128xf32>
    %22 = arith.addf %19, %21 : vector<32x128xf32>
    %c0_17 = arith.constant 0 : index
    %c0_18 = arith.constant 0 : index
    %c0_19 = arith.constant 0 : index
    %c0_20 = arith.constant 0 : index
    %23 = vector.load %arg5[%c0_17, %c0_18, %c0_19, %c0_20] : memref<1x1x32x128xf32, #tpu.memory_space<vmem>>, vector<1x1x32x128xf32>
    %24 = vector.shape_cast %23 : vector<1x1x32x128xf32> to vector<32x128xf32>
    %25 = vector.shape_cast %22 : vector<32x128xf32> to vector<1x1x32x128xf32>
    tpu.vector_store %arg5[%c0_17, %c0_18, %c0_19, %c0_20], %25 {strides = array<i32>} : memref<1x1x32x128xf32, #tpu.memory_space<vmem>>, vector<1x1x32x128xf32>,
    return
  }
  func.func @transform_0(%arg0: i32, %arg1: i32) -> (i32, i32, i32, i32) {
    %c0_i32 = arith.constant 0 : i32
    %c0_i32_0 = arith.constant 0 : i32
    %c0_i32_1 = arith.constant 0 : i32
    return %arg0, %arg1, %c0_i32, %c0_i32_0 : i32, i32, i32, i32
  }
  func.func @transform_1(%arg0: i32, %arg1: i32) -> (i32, i32, i32) {
    %c0_i32 = arith.constant 0 : i32
    %c0_i32_0 = arith.constant 0 : i32
    %c0_i32_1 = arith.constant 0 : i32
    %c0_i32_2 = arith.constant 0 : i32
    return %c0_i32, %c0_i32_0, %c0_i32_1 : i32, i32, i32
  }
  func.func @transform_2(%arg0: i32, %arg1: i32) -> (i32, i32) {
    %c0_i32 = arith.constant 0 : i32
    %c0_i32_0 = arith.constant 0 : i32
    %c0_i32_1 = arith.constant 0 : i32
    return %c0_i32, %c0_i32_0 : i32, i32
  }
  func.func @transform_3(%arg0: i32, %arg1: i32) -> (i32, i32, i32, i32) {
    %c0_i32 = arith.constant 0 : i32
    %c0_i32_0 = arith.constant 0 : i32
    %c0_i32_1 = arith.constant 0 : i32
    return %arg0, %arg1, %c0_i32, %c0_i32_0 : i32, i32, i32, i32
  }
}

</mosaic_0001>

<llo_original>
// kernel: tile.8
$region0: #{tile.8}
  #allocation2 [shape = 's32[1]{0}', space=sflag, size = 0x4, scoped, tag = 'scoped memory for tile.8']
  %s0 = inlined_call_operand.hbm [shape: f32[8], index: 0, kind: input, shape index: {}]
  %s1 = inlined_call_operand.vmem [shape: f32[4,8], index: 1, kind: output, shape index: {}]
  $region1: #{tile.8} parent=0
    #allocation0 [shape = 'u8[512]{0}', space=vmem, size = 0x400, scoped, tag = 'operand span for operand 0']
    #allocation1 [shape = 's32[1]{0}', space=sflag, size = 0x4, scoped, tag = 'scoped memory for tile.8']
    %2 = vsyncpa [#allocation1], 0
    // Predicated region
    $region2: #{tile.8} parent=1 // pred_check
      _
    $region3: #{tile.8} parent=1 // pred_check_branch
      %4 = sbr.rel (0) target = $region5
    $region4: #{tile.8} parent=1 // pred_region
      %6 = vsyncadd [#allocation1], 0
      %s8 = sshll.u32 %s0, 4
      %s9 = int_to_ptr.hbm [resolvable:$true] %s8
      %s10 = sshll.u32 [#allocation0], 4
      %s11 = int_to_ptr.vmem [resolvable:$true] %s10
      %13 = dma.hbm_to_vmem [thread:$0]  %s9, 16, %s11, [#allocation1]
    $region5: #{tile.8} parent=1 // pred_fallthru
      _
    // Predicated region
    $region6: #{tile.8} parent=1 // pred_check
      _
    $region7: #{tile.8} parent=1 // pred_check_branch
      %15 = sbr.rel (0) target = $region9
    $region8: #{tile.8} parent=1 // pred_region
      %17 = dma.done [#allocation1], 16
    $region9: #{tile.8} parent=1 // pred_fallthru
      _
    %v18 = vld [vmem:[#allocation0] ss:$0 sm:$0xff]
    %19 = vst [vmem:[%s1] sm:$0xf] %v18
    %20 = vsyncpa [#allocation1], 1

// kernel: tile.0
$region0: #{tile.0}
  %s0 = inlined_call_operand.vmem [shape: f32[4,8], index: 0, kind: input, shape index: {}]
  %s1 = inlined_call_operand.vmem [shape: f32[32,1], index: 1, kind: output, shape index: {}]
  $region1: #{tile.0} parent=0
    #allocation0 [shape = 'u8[4096]{0}', space=vmem, size = 0x1000, scoped, tag = 'scoped mem for input reshape']
    %s3 = ssub.s32 16, 1
    %v4 = vld [vmem:[%s0] sm:%s3]
    %5 = vst [vmem:[#allocation0] sm:%s3] %v4
    %v6 = vld [vmem:[#allocation0] sm:$0xf]
    %vm7 = vcmask 7168
    %8 = vst.msk [vmem:[%s1] ss:$8 sm:$0xf] %vm7, %v6
    %v9 = vld [vmem:[#allocation0] sm:$0xf]
    %10 = vrot.lane.b32.xlu0 %v9, 127
    %v11 = vpop.permute.xlu0 %10
    %vm12 = vcmask 7168
    %s13 = scalar_lea.vmem %s1, 1
    %14 = vst.msk [vmem:[%s13] ss:$8 sm:$0xf] %vm12, %v11
    %v15 = vld [vmem:[#allocation0] sm:$0xf]
    %16 = vrot.lane.b32.xlu0 %v15, 126
    %v17 = vpop.permute.xlu0 %16
    %vm18 = vcmask 7168
    %s19 = scalar_lea.vmem %s1, 2
    %20 = vst.msk [vmem:[%s19] ss:$8 sm:$0xf] %vm18, %v17
    %v21 = vld [vmem:[#allocation0] sm:$0xf]
    %22 = vrot.lane.b32.xlu0 %v21, 125
    %v23 = vpop.permute.xlu0 %22
    %vm24 = vcmask 7168
    %s25 = scalar_lea.vmem %s1, 3
    %26 = vst.msk [vmem:[%s25] ss:$8 sm:$0xf] %vm24, %v23
    %v27 = vld [vmem:[#allocation0] sm:$0xf]
    %28 = vrot.lane.b32.xlu0 %v27, 124
    %v29 = vpop.permute.xlu0 %28
    %vm30 = vcmask 7168
    %s31 = scalar_lea.vmem %s1, 4
    %32 = vst.msk [vmem:[%s31] ss:$8 sm:$0xf] %vm30, %v29
    %v33 = vld [vmem:[#allocation0] sm:$0xf]
    %34 = vrot.lane.b32.xlu0 %v33, 123
    %v35 = vpop.permute.xlu0 %34
    %vm36 = vcmask 7168
    %s37 = scalar_lea.vmem %s1, 5
    %38 = vst.msk [vmem:[%s37] ss:$8 sm:$0xf] %vm36, %v35
    %v39 = vld [vmem:[#allocation0] sm:$0xf]
    %40 = vrot.lane.b32.xlu0 %v39, 122
    %v41 = vpop.permute.xlu0 %40
    %vm42 = vcmask 7168
    %s43 = scalar_lea.vmem %s1, 6
    %44 = vst.msk [vmem:[%s43] ss:$8 sm:$0xf] %vm42, %v41
    %v45 = vld [vmem:[#allocation0] sm:$0xf]
    %46 = vrot.lane.b32.xlu0 %v45, 121
    %v47 = vpop.permute.xlu0 %46
    %vm48 = vcmask 7168
    %s49 = scalar_lea.vmem %s1, 7
    %50 = vst.msk [vmem:[%s49] ss:$8 sm:$0xf] %vm48, %v47

// kernel: upsample_conv_transpose2d.1
$region0: #{upsample_conv_transpose2d.1}
  #allocation0 [shape = 'u32[]', space=smem, size = 0x4, offset = 0x4, fixed_abs, tag = 'smem constant byte address 0x4 - core index']
  #allocation1 [shape = 'u32[72,128]{1,0:T(1,128)}', space=vmem, size = 0x9000, scoped, tag = 'internal scratch']
  %s0 = inlined_call_operand.vmem [shape: f32[2,3,8,128], index: 0, kind: input, shape index: {}]
  %s1 = inlined_call_operand.vmem [shape: f32[4,32,8], index: 1, kind: input, shape index: {}]
  %s2 = inlined_call_operand.vmem [shape: f32[32,1], index: 2, kind: input, shape index: {}]
  %s3 = inlined_call_operand.vmem [shape: f32[2,3,32,128], index: 3, kind: output, shape index: {}]
  %s4 = sld [smem:[#allocation0]]
  $region45: #{upsample_conv_transpose2d.1} parent=0
    _
  %s6 = ssub.s32 1, %s4
  %s7 = scalar_select 0, %s6, %s4
  loop: start=0, step=1, limit=8
  $region2: #{upsample_conv_transpose2d.1} parent=0 // loop_pre_header
    _
  $region3: #{upsample_conv_transpose2d.1} parent=0 // loop_header
    %s9 = sphi 0, %s13
    %p10 = scmp.ge.s32.totalorder %s9, 8
    %s16 = sphi 0, %s28
    %s17 = sphi 0, %s24
    %s18 = sphi 0, %s16
    %s19 = sphi 0, %s17
    %s20 = sphi 0, %s18
    %s21 = sphi 0, %s19
    %s33 = sphi 0, %s35
    %s36 = sphi 0, %s33
    %s37 = sphi 0, %s36
    %s53 = sphi 0, %s37
    %s57 = sphi 0, %s57
    %s59 = sphi 0, %s57
    %s60 = sphi 0, %s59
    %s74 = sphi 0, %s60
    %s78 = sphi 0, %s78
    %s80 = sphi 0, %s78
    %s81 = sphi 0, %s80
    %s95 = sphi 0, %s81
    %s103 = sphi 0, %s105
    %s106 = sphi 0, %s103
    %s107 = sphi 0, %s106
    %s123 = sphi 0, %s107
  $region4: #{upsample_conv_transpose2d.1} parent=0 // loop_header_branch
    %12 = sbr.rel (%p10) target = $region8
  $region5: #{upsample_conv_transpose2d.1} parent=0 // loop_body
    %s14 = ssub.s32 %s9, 1
    %s15 = ssub.s32 %s9, 2
    %s22 = sadd.s32 1, %s17
    %p23 = scmp.ge.s32.totalorder %s22, 3
    %s24 = scalar_select %p23, 0, %s22
    %s25 = sadd.s32 1, %s16
    %s26 = scalar_select %p23, %s25, %s16
    %p27 = scmp.ge.s32.totalorder %s26, 2
    %s28 = scalar_select %p27, 0, %s26
    %s29 = ssub.s32 %s16, %s28
    %s30 = ssub.s32 %s17, %s24
    %s31 = sor.u32 %s29, %s30
    %p32 = scmp.eq.s32.totalorder %s31, 0
    %s34 = sadd.s32 %s33, 1
    %s35 = scalar_select %p32, %s33, %s34
    %p38 = pneg %p32
    %p39 = scmp.eq.s32.totalorder %s9, 5
    %p40 = por %p38, %p39
    %p41 = scmp.ne.s32.totalorder %s33, %s36
    %p42 = scmp.eq.s32.totalorder %s9, 0
    %p43 = por %p41, %p42
    %p44 = scmp.ne.s32.totalorder %s33, %s36
    %p45 = scmp.eq.s32.totalorder %s14, 5
    %p46 = por %p44, %p45
    %p47 = scmp.ne.s32.totalorder %s36, %s37
    %p48 = scmp.eq.s32.totalorder %s14, 0
    %p49 = por %p47, %p48
    %p50 = scmp.ne.s32.totalorder %s36, %s37
    %p51 = scmp.eq.s32.totalorder %s15, 5
    %p52 = por %p50, %p51
    %p54 = scmp.ne.s32.totalorder %s37, %s53
    %p55 = scmp.eq.s32.totalorder %s15, 0
    %p56 = por %p54, %p55
    %s58 = sadd.s32 %s57, 1
    %p61 = scmp.eq.s32.totalorder %s9, 5
    %p62 = scmp.ne.s32.totalorder %s57, %s59
    %p63 = scmp.eq.s32.totalorder %s9, 0
    %p64 = por %p62, %p63
    %p65 = scmp.ne.s32.totalorder %s57, %s59
    %p66 = scmp.eq.s32.totalorder %s14, 5
    %p67 = por %p65, %p66
    %p68 = scmp.ne.s32.totalorder %s59, %s60
    %p69 = scmp.eq.s32.totalorder %s14, 0
    %p70 = por %p68, %p69
    %p71 = scmp.ne.s32.totalorder %s59, %s60
    %p72 = scmp.eq.s32.totalorder %s15, 5
    %p73 = por %p71, %p72
    %p75 = scmp.ne.s32.totalorder %s60, %s74
    %p76 = scmp.eq.s32.totalorder %s15, 0
    %p77 = por %p75, %p76
    %s79 = sadd.s32 %s78, 1
    %p82 = scmp.eq.s32.totalorder %s9, 5
    %p83 = scmp.ne.s32.totalorder %s78, %s80
    %p84 = scmp.eq.s32.totalorder %s9, 0
    %p85 = por %p83, %p84
    %p86 = scmp.ne.s32.totalorder %s78, %s80
    %p87 = scmp.eq.s32.totalorder %s14, 5
    %p88 = por %p86, %p87
    %p89 = scmp.ne.s32.totalorder %s80, %s81
    %p90 = scmp.eq.s32.totalorder %s14, 0
    %p91 = por %p89, %p90
    %p92 = scmp.ne.s32.totalorder %s80, %s81
    %p93 = scmp.eq.s32.totalorder %s15, 5
    %p94 = por %p92, %p93
    %p96 = scmp.ne.s32.totalorder %s81, %s95
    %p97 = scmp.eq.s32.totalorder %s15, 0
    %p98 = por %p96, %p97
    %s99 = ssub.s32 %s16, %s28
    %s100 = ssub.s32 %s17, %s24
    %s101 = sor.u32 %s99, %s100
    %p102 = scmp.eq.s32.totalorder %s101, 0
    %s104 = sadd.s32 %s103, 1
    %s105 = scalar_select %p102, %s103, %s104
    %p108 = pneg %p102
    %p109 = scmp.eq.s32.totalorder %s9, 5
    %p110 = por %p108, %p109
    %p111 = scmp.ne.s32.totalorder %s103, %s106
    %p112 = scmp.eq.s32.totalorder %s9, 0
    %p113 = por %p111, %p112
    %p114 = scmp.ne.s32.totalorder %s103, %s106
    %p115 = scmp.eq.s32.totalorder %s14, 5
    %p116 = por %p114, %p115
    %p117 = scmp.ne.s32.totalorder %s106, %s107
    %p118 = scmp.eq.s32.totalorder %s14, 0
    %p119 = por %p117, %p118
    %p120 = scmp.ne.s32.totalorder %s106, %s107
    %p121 = scmp.eq.s32.totalorder %s15, 5
    %p122 = por %p120, %p121
    %p124 = scmp.ne.s32.totalorder %s107, %s123
    %p125 = scmp.eq.s32.totalorder %s15, 0
    %p126 = por %p124, %p125
    %p127 = scmp.le.s32.totalorder 1, %s9
    %p128 = scmp.lt.s32.totalorder %s9, 7
    %p129 = pnand %p127, %p128
    %p130 = pneg %p129
    // Predicated region
    $region9: #{upsample_conv_transpose2d.1} parent=5 // pred_check
      _
    $region10: #{upsample_conv_transpose2d.1} parent=5 // pred_check_branch
      %132 = sbr.rel (%p129) target = $region12
    $region11: #{upsample_conv_transpose2d.1} parent=5 // pred_region
      %s133 = ssub.s32 %s9, 1
      // Predicated region
      $region13: #{upsample_conv_transpose2d.1} parent=11 // pred_check
        %p134 = pneg %p70
      $region14: #{upsample_conv_transpose2d.1} parent=11 // pred_check_branch
        %136 = sbr.rel (%p134) target = $region16
      $region15: #{upsample_conv_transpose2d.1} parent=11 // pred_region
        _
      $region16: #{upsample_conv_transpose2d.1} parent=11 // pred_fallthru
        _
      // Predicated region
      $region17: #{upsample_conv_transpose2d.1} parent=11 // pred_check
        %p137 = pneg %p91
      $region18: #{upsample_conv_transpose2d.1} parent=11 // pred_check_branch
        %139 = sbr.rel (%p137) target = $region20
      $region19: #{upsample_conv_transpose2d.1} parent=11 // pred_region
        _
      $region20: #{upsample_conv_transpose2d.1} parent=11 // pred_fallthru
        _
    $region12: #{upsample_conv_transpose2d.1} parent=5 // pred_fallthru
      _
    %p140 = scmp.lt.s32.totalorder %s9, 6
    // Predicated region
    $region21: #{upsample_conv_transpose2d.1} parent=5 // pred_check
      %p141 = pneg %p140
    $region22: #{upsample_conv_transpose2d.1} parent=5 // pred_check_branch
      %143 = sbr.rel (%p141) target = $region24
    $region23: #{upsample_conv_transpose2d.1} parent=5 // pred_region
      // Predicated region
      $region25: #{upsample_conv_transpose2d.1} parent=23 // pred_check
        %p144 = pneg %p43
      $region26: #{upsample_conv_transpose2d.1} parent=23 // pred_check_branch
        %146 = sbr.rel (%p144) target = $region28
      $region27: #{upsample_conv_transpose2d.1} parent=23 // pred_region
        %p147 = scmp.lt.s32.totalorder %s16, 1
        %s148 = scalar_select %p147, %s16, 1
        %p149 = scmp.lt.s32.totalorder %s17, 2
        %s150 = scalar_select %p149, %s17, 2
        %s151 = smul.addr %s148, 3
        %s152 = sadd.s32 %s150, %s151
        %s153 = smul.addr %s152, 8
        %s154 = scalar_lea.vmem %s0, %s153
      $region28: #{upsample_conv_transpose2d.1} parent=23 // pred_fallthru
        _
    $region24: #{upsample_conv_transpose2d.1} parent=5 // pred_fallthru
      _
    %p155 = scmp.le.s32.totalorder 1, %s9
    %p156 = scmp.lt.s32.totalorder %s9, 7
    %p157 = pnand %p155, %p156
    %p158 = pneg %p157
    // Predicated region
    $region29: #{upsample_conv_transpose2d.1} parent=5 // pred_check
      _
    $region30: #{upsample_conv_transpose2d.1} parent=5 // pred_check_branch
      %160 = sbr.rel (%p157) target = $region32
    $region31: #{upsample_conv_transpose2d.1} parent=5 // pred_region
      %s161 = ssub.s32 %s9, 1
      %p162 = scmp.lt.s32.totalorder %s18, 1
      %s163 = scalar_select %p162, %s18, 1
      %p164 = scmp.lt.s32.totalorder %s19, 2
      %s165 = scalar_select %p164, %s19, 2
      %s166 = smul.addr %s163, 3
      %s167 = sadd.s32 %s165, %s166
      %s168 = smul.addr %s167, 8
      %s169 = scalar_lea.vmem %s0, %s168
      %p170 = pneg %p49
      %p171 = pneg %p46
      %p172 = pneg %p70
      %p173 = pneg %p67
      %p174 = pneg %p91
      %p175 = pneg %p88
      %p176 = pneg %p119
      %p177 = pneg %p116
      %p178 = scmp.lt.s32.totalorder %s18, 1
      %s179 = scalar_select %p178, %s18, 1
      %p180 = scmp.lt.s32.totalorder %s19, 2
      %s181 = scalar_select %p180, %s19, 2
      %s182 = smul.addr %s181, 4
      %s183 = smul.addr %s179, 12
      %s184 = sadd.s32 %s182, %s183
      %s185 = smul.addr %s184, 8
      %s186 = scalar_lea.vmem %s3, %s185
      %p187 = scmp.lt.s32.totalorder %s18, 1
      %s188 = scalar_select %p187, %s18, 1
      %p189 = scmp.lt.s32.totalorder %s19, 2
      %s190 = scalar_select %p189, %s19, 2
      %s191 = smul.addr %s188, 3
      %s192 = sadd.s32 %s190, %s191
      %s193 = smul.addr %s192, 8
      %s194 = scalar_lea.vmem %s0, %s193
      %p195 = scmp.lt.s32.totalorder %s18, 1
      %s196 = scalar_select %p195, %s18, 1
      %p197 = scmp.lt.s32.totalorder %s19, 2
      %s198 = scalar_select %p197, %s19, 2
      %s199 = smul.addr %s198, 4
      %s200 = smul.addr %s196, 12
      %s201 = sadd.s32 %s199, %s200
      %s202 = smul.addr %s201, 8
      %s203 = scalar_lea.vmem %s3, %s202
      %v204 = vld [vmem:[%s194] sm:$0xff]
      %v205 = vld [vmem:[%s1] sm:$0xff]
      %v206 = vld [vmem:[%s1 + $0x8] sm:$0xff]
      %v207 = vld [vmem:[%s1 + $0x10] sm:$0xff]
      %v208 = vld [vmem:[%s1 + $0x18] sm:$0xff]
      %209 = vrot.lane.b32.xlu0 %v204, 127
      %v210 = vpop.permute.xlu0 %209
      %s211 = scalar_lea.vmem %s1, 32
      %v212 = vld [vmem:[%s211] sm:$0xff]
      %v213 = vld [vmem:[%s211 + $0x8] sm:$0xff]
      %v214 = vld [vmem:[%s211 + $0x10] sm:$0xff]
      %v215 = vld [vmem:[%s211 + $0x18] sm:$0xff]
      %vm216 = vcmask 64512
      %v218 = vsel %vm216, %v212, 0
      %v221 = vsel %vm216, %v213, 0
      %v224 = vsel %vm216, %v214, 0
      %v227 = vsel %vm216, %v215, 0
      %229 = vmatpush.msra.mxu0 0.0
      %230 = vmatpush.msra.mxu0 0.0
      %231 = vmatpush.msra.mxu0 0.0
      %232 = vmatpush.msra.mxu0 0.0
      %233 = vmatpush.msra.mxu0 0.0
      %234 = vmatpush.msra.mxu0 0.0
      %235 = vmatpush.msra.mxu0 0.0
      %236 = vmatpush.msra.mxu0 0.0
      %237 = vmatpush.msra.mxu0 0.0
      %238 = vmatpush.msra.mxu0 0.0
      %239 = vmatpush.msra.mxu0 0.0
      %240 = vmatpush.msra.mxu0 0.0
      %241 = vmatpush.msra.mxu0 0.0
      %242 = vmatpush.msra.mxu0 0.0
      %243 = vmatpush.msra.mxu0 0.0
      %244 = vmatpush.msra.mxu0 %v210
      %245 = vmatmul.f32.gmra.mxu0 %v218
      %v246 = vpop.f32.mrf.mxu0
      %v247 = vadd.f32 0.0, %v246
      %248 = vmatmul.f32.gmra.mxu0 %v221
      %v249 = vpop.f32.mrf.mxu0
      %v250 = vadd.f32 0.0, %v249
      %251 = vmatmul.f32.gmra.mxu0 %v224
      %v252 = vpop.f32.mrf.mxu0
      %v253 = vadd.f32 0.0, %v252
      %254 = vmatmul.f32.gmra.mxu0 %v227
      %v255 = vpop.f32.mrf.mxu0
      %v256 = vadd.f32 0.0, %v255
      %257 = vdwg.mxu0
      %v259 = vsel %vm216, %v205, 0
      %v262 = vsel %vm216, %v206, 0
      %v265 = vsel %vm216, %v207, 0
      %v268 = vsel %vm216, %v208, 0
      %270 = vmatpush.msra.mxu0 0.0
      %271 = vmatpush.msra.mxu0 0.0
      %272 = vmatpush.msra.mxu0 0.0
      %273 = vmatpush.msra.mxu0 0.0
      %274 = vmatpush.msra.mxu0 0.0
      %275 = vmatpush.msra.mxu0 0.0
      %276 = vmatpush.msra.mxu0 0.0
      %277 = vmatpush.msra.mxu0 0.0
      %278 = vmatpush.msra.mxu0 0.0
      %279 = vmatpush.msra.mxu0 0.0
      %280 = vmatpush.msra.mxu0 0.0
      %281 = vmatpush.msra.mxu0 0.0
      %282 = vmatpush.msra.mxu0 0.0
      %283 = vmatpush.msra.mxu0 0.0
      %284 = vmatpush.msra.mxu0 0.0
      %285 = vmatpush.msra.mxu0 %v204
      %286 = vmatmul.f32.gmra.mxu0 %v259
      %v287 = vpop.f32.mrf.mxu0
      %v288 = vadd.f32 %v247, %v287
      %289 = vmatmul.f32.gmra.mxu0 %v262
      %v290 = vpop.f32.mrf.mxu0
      %v291 = vadd.f32 %v250, %v290
      %292 = vmatmul.f32.gmra.mxu0 %v265
      %v293 = vpop.f32.mrf.mxu0
      %v294 = vadd.f32 %v253, %v293
      %295 = vmatmul.f32.gmra.mxu0 %v268
      %v296 = vpop.f32.mrf.mxu0
      %v297 = vadd.f32 %v256, %v296
      %298 = vdwg.mxu0
      %299 = vrot.lane.b32.xlu0 %v204, 110
      %v300 = vpop.permute.xlu0 %299
      %s301 = scalar_lea.vmem %s1, 64
      %v302 = vld [vmem:[%s301] sm:$0xff]
      %v303 = vld [vmem:[%s301 + $0x8] sm:$0xff]
      %v304 = vld [vmem:[%s301 + $0x10] sm:$0xff]
      %v305 = vld [vmem:[%s301 + $0x18] sm:$0xff]
      %v307 = vsel %vm216, %v302, 0
      %v310 = vsel %vm216, %v303, 0
      %v313 = vsel %vm216, %v304, 0
      %v316 = vsel %vm216, %v305, 0
      %318 = vmatpush.msra.mxu0 0.0
      %319 = vmatpush.msra.mxu0 0.0
      %320 = vmatpush.msra.mxu0 0.0
      %321 = vmatpush.msra.mxu0 0.0
      %322 = vmatpush.msra.mxu0 0.0
      %323 = vmatpush.msra.mxu0 0.0
      %324 = vmatpush.msra.mxu0 0.0
      %325 = vmatpush.msra.mxu0 0.0
      %326 = vmatpush.msra.mxu0 0.0
      %327 = vmatpush.msra.mxu0 0.0
      %328 = vmatpush.msra.mxu0 0.0
      %329 = vmatpush.msra.mxu0 0.0
      %330 = vmatpush.msra.mxu0 0.0
      %331 = vmatpush.msra.mxu0 0.0
      %332 = vmatpush.msra.mxu0 0.0
      %333 = vmatpush.msra.mxu0 %v300
      %334 = vmatmul.f32.gmra.mxu0 %v307
      %v335 = vpop.f32.mrf.mxu0
      %v336 = vadd.f32 0.0, %v335
      %337 = vmatmul.f32.gmra.mxu0 %v310
      %v338 = vpop.f32.mrf.mxu0
      %v339 = vadd.f32 0.0, %v338
      %340 = vmatmul.f32.gmra.mxu0 %v313
      %v341 = vpop.f32.mrf.mxu0
      %v342 = vadd.f32 0.0, %v341
      %343 = vmatmul.f32.gmra.mxu0 %v316
      %v344 = vpop.f32.mrf.mxu0
      %v345 = vadd.f32 0.0, %v344
      %346 = vdwg.mxu0
      %v347 = vadd.f32 %v288, %v336
      %v348 = vadd.f32 %v291, %v339
      %v349 = vadd.f32 %v294, %v342
      %v350 = vadd.f32 %v297, %v345
      %351 = vrot.lane.b32.xlu0 %v204, 109
      %v352 = vpop.permute.xlu0 %351
      %s353 = scalar_lea.vmem %s1, 96
      %v354 = vld [vmem:[%s353] sm:$0xff]
      %v355 = vld [vmem:[%s353 + $0x8] sm:$0xff]
      %v356 = vld [vmem:[%s353 + $0x10] sm:$0xff]
      %v357 = vld [vmem:[%s353 + $0x18] sm:$0xff]
      %v359 = vsel %vm216, %v354, 0
      %v362 = vsel %vm216, %v355, 0
      %v365 = vsel %vm216, %v356, 0
      %v368 = vsel %vm216, %v357, 0
      %370 = vmatpush.msra.mxu0 0.0
      %371 = vmatpush.msra.mxu0 0.0
      %372 = vmatpush.msra.mxu0 0.0
      %373 = vmatpush.msra.mxu0 0.0
      %374 = vmatpush.msra.mxu0 0.0
      %375 = vmatpush.msra.mxu0 0.0
      %376 = vmatpush.msra.mxu0 0.0
      %377 = vmatpush.msra.mxu0 0.0
      %378 = vmatpush.msra.mxu0 0.0
      %379 = vmatpush.msra.mxu0 0.0
      %380 = vmatpush.msra.mxu0 0.0
      %381 = vmatpush.msra.mxu0 0.0
      %382 = vmatpush.msra.mxu0 0.0
      %383 = vmatpush.msra.mxu0 0.0
      %384 = vmatpush.msra.mxu0 0.0
      %385 = vmatpush.msra.mxu0 %v352
      %386 = vmatmul.f32.gmra.mxu0 %v359
      %v387 = vpop.f32.mrf.mxu0
      %v388 = vadd.f32 0.0, %v387
      %389 = vmatmul.f32.gmra.mxu0 %v362
      %v390 = vpop.f32.mrf.mxu0
      %v391 = vadd.f32 0.0, %v390
      %392 = vmatmul.f32.gmra.mxu0 %v365
      %v393 = vpop.f32.mrf.mxu0
      %v394 = vadd.f32 0.0, %v393
      %395 = vmatmul.f32.gmra.mxu0 %v368
      %v396 = vpop.f32.mrf.mxu0
      %v397 = vadd.f32 0.0, %v396
      %398 = vdwg.mxu0
      %v399 = vadd.f32 %v347, %v388
      %v400 = vadd.f32 %v348, %v391
      %v401 = vadd.f32 %v349, %v394
      %v402 = vadd.f32 %v350, %v397
      %v403 = vld [vmem:[%s2] sm:$0xff]
      %v404 = vld [vmem:[%s2 + $0x8] sm:$0xff]
      %v405 = vld [vmem:[%s2 + $0x10] sm:$0xff]
      %v406 = vld [vmem:[%s2 + $0x18] sm:$0xff]
      %408 = vset.pattern.permute.xlu0 0
      %409 = vperm.xlu0 %408, %v403
      %v410 = vpop.permute.xlu0 %409
      %413 = vset.pattern.permute.xlu0 0
      %414 = vperm.xlu0 %413, %v404
      %v415 = vpop.permute.xlu0 %414
      %418 = vset.pattern.permute.xlu0 0
      %419 = vperm.xlu0 %418, %v405
      %v420 = vpop.permute.xlu0 %419
      %423 = vset.pattern.permute.xlu0 0
      %424 = vperm.xlu0 %423, %v406
      %v425 = vpop.permute.xlu0 %424
      %v427 = vadd.f32 %v399, %v410
      %v428 = vadd.f32 %v400, %v415
      %v429 = vadd.f32 %v401, %v420
      %v430 = vadd.f32 %v402, %v425
      %431 = vst [vmem:[%s203] sm:$0xff] %v427
      %432 = vst [vmem:[%s203 + $0x8] sm:$0xff] %v428
      %433 = vst [vmem:[%s203 + $0x10] sm:$0xff] %v429
      %434 = vst [vmem:[%s203 + $0x18] sm:$0xff] %v430
      %p435 = scmp.lt.s32.totalorder %s18, 1
      %s436 = scalar_select %p435, %s18, 1
      %p437 = scmp.lt.s32.totalorder %s19, 2
      %s438 = scalar_select %p437, %s19, 2
      %s439 = smul.addr %s438, 4
      %s440 = smul.addr %s436, 12
      %s441 = sadd.s32 %s439, %s440
      %s442 = smul.addr %s441, 8
      %s443 = scalar_lea.vmem %s3, %s442
      // Predicated region
      $region33: #{upsample_conv_transpose2d.1} parent=31 // pred_check
        %p444 = pneg %p116
      $region34: #{upsample_conv_transpose2d.1} parent=31 // pred_check_branch
        %446 = sbr.rel (%p444) target = $region36
      $region35: #{upsample_conv_transpose2d.1} parent=31 // pred_region
        _
      $region36: #{upsample_conv_transpose2d.1} parent=31 // pred_fallthru
        _
    $region32: #{upsample_conv_transpose2d.1} parent=5 // pred_fallthru
      _
    %p447 = scmp.le.s32.totalorder 2, %s9
    // Predicated region
    $region37: #{upsample_conv_transpose2d.1} parent=5 // pred_check
      %p448 = pneg %p447
    $region38: #{upsample_conv_transpose2d.1} parent=5 // pred_check_branch
      %450 = sbr.rel (%p448) target = $region40
    $region39: #{upsample_conv_transpose2d.1} parent=5 // pred_region
      %s451 = ssub.s32 %s9, 2
      // Predicated region
      $region41: #{upsample_conv_transpose2d.1} parent=39 // pred_check
        %p452 = pneg %p122
      $region42: #{upsample_conv_transpose2d.1} parent=39 // pred_check_branch
        %454 = sbr.rel (%p452) target = $region44
      $region43: #{upsample_conv_transpose2d.1} parent=39 // pred_region
        %p455 = scmp.lt.s32.totalorder %s20, 1
        %s456 = scalar_select %p455, %s20, 1
        %p457 = scmp.lt.s32.totalorder %s21, 2
        %s458 = scalar_select %p457, %s21, 2
        %s459 = smul.addr %s458, 4
        %s460 = smul.addr %s456, 12
        %s461 = sadd.s32 %s459, %s460
        %s462 = smul.addr %s461, 8
        %s463 = scalar_lea.vmem %s3, %s462
      $region44: #{upsample_conv_transpose2d.1} parent=39 // pred_fallthru
        _
    $region40: #{upsample_conv_transpose2d.1} parent=5 // pred_fallthru
      _
  $region6: #{upsample_conv_transpose2d.1} parent=0 // loop_footer
    %s13 = sadd.s32 1, %s9
  $region7: #{upsample_conv_transpose2d.1} parent=0 // loop_footer_branch
    %8 = sbr.rel target = $region3
  $region8: #{upsample_conv_transpose2d.1} parent=0 // loop_exit
    _

</llo_original>
